<compile_context>
chip_gen: v7x
topology: tpu7x:2x2x1
jax: 0.10.0
libtpu: 0.0.40
codegen_flags: <defaults>
</compile_context>

<pallas_src>
import jax
import jax.numpy as jnp
from jax.experimental import pallas as pl
from jax.experimental.pallas import tpu as pltpu

N_FEATURES = 100
H0, H1, H2 = 256, 128, 256
N_OUT = 10000

F_PAD = 128          # 100 -> 128 (lane-dense K for the first matmul)
N_OUT_PAD = 10240    # 10000 -> 10240 (multiple of 128 and of TN)
TN = 2560            # output-feature tile width -> 4 grid steps (even)
B_SUBLANE = 8        # pad batch to a multiple of the f32 sublane width


def _leaky_relu(x, slope=0.2):
    return jnp.where(x > 0, x, slope * x)


# ---------------------------------------------------------------------------
# Kernel 1: the three small hidden layers, computed once (single shot, no grid).
# Everything here is tiny (< 200 KB of weights), fits in VMEM trivially.
# ---------------------------------------------------------------------------
def hidden_kernel(x_ref,
                  w0_ref, b0_ref,
                  w1_ref, b1_ref,
                  w2_ref, b2_ref,
                  h_ref):
    x = x_ref[...]                                                # (Bp, F_PAD) f32
    h = jnp.dot(x.astype(jnp.bfloat16), w0_ref[...],
                preferred_element_type=jnp.float32)
    h = _leaky_relu(h + b0_ref[...])
    h = jnp.dot(h.astype(jnp.bfloat16), w1_ref[...],
                preferred_element_type=jnp.float32)
    h = _leaky_relu(h + b1_ref[...])
    h = jnp.dot(h.astype(jnp.bfloat16), w2_ref[...],
                preferred_element_type=jnp.float32)
    h = _leaky_relu(h + b2_ref[...])                              # (Bp, H2) f32
    h_ref[...] = h.astype(jnp.bfloat16)


# ---------------------------------------------------------------------------
# Kernel 2: the streamed output layer.  One (H2, TN) bf16 w3 tile per grid
# step, double-buffered by BlockSpec so the dominant weight DMA overlaps the
# matmul + tanh + bf16 writeback.
# ---------------------------------------------------------------------------
def out_kernel(h_ref, w3_ref, b3_ref, o_ref):
    y = jnp.dot(h_ref[...], w3_ref[...], preferred_element_type=jnp.float32)
    o_ref[...] = jnp.tanh(y + b3_ref[...]).astype(o_ref.dtype)


def generator_forward(x, params):
    """x: (B, 100) f32. params: padded, pre-transposed bf16 weights + f32 biases.
    Returns (B, 10000) f32."""
    B = x.shape[0]
    b_pad = ((B + B_SUBLANE - 1) // B_SUBLANE) * B_SUBLANE
    x_pad = jnp.zeros((b_pad, F_PAD), jnp.float32).at[:B, :N_FEATURES].set(x)

    # --- small hidden layers, computed exactly once --------------------------
    h = pl.pallas_call(
        hidden_kernel,
        out_shape=jax.ShapeDtypeStruct((b_pad, H2), jnp.bfloat16),
    )(x_pad,
      params["w0"], params["b0"],
      params["w1"], params["b1"],
      params["w2"], params["b2"])

    # --- streamed output layer ----------------------------------------------
    grid = (N_OUT_PAD // TN,)   # 4 steps
    resident = lambda j: (0, 0)

    out_pad = pl.pallas_call(
        out_kernel,
        out_shape=jax.ShapeDtypeStruct((b_pad, N_OUT_PAD), jnp.bfloat16),
        grid_spec=pl.GridSpec(
            grid=grid,
            in_specs=[
                pl.BlockSpec((b_pad, H2), resident),       # h (resident, bf16)
                pl.BlockSpec((H2, TN), lambda j: (0, j)),  # w3 tile (streamed)
                pl.BlockSpec((1, TN), lambda j: (0, j)),   # b3 tile (streamed)
            ],
            out_specs=pl.BlockSpec((b_pad, TN), lambda j: (0, j)),
        ),
        compiler_params=pltpu.CompilerParams(
            dimension_semantics=("parallel",),
            vmem_limit_bytes=32 << 20,
        ),
    )(h, params["w3"], params["b3"])

    return out_pad[:B, :N_OUT].astype(jnp.float32)


def init_params(key):
    """nn.Linear-style init U(-1/sqrt(fan_in), +1/sqrt(fan_in)), pre-transposed
    to (in, out), zero-padded to lane-friendly shapes.  Returns both the bf16
    padded params used by the kernel and the f32 unpadded originals used by
    the full-precision reference."""
    def linear(key, fan_in, fan_out, pad_in, pad_out):
        kw, kb = jax.random.split(key)
        bound = 1.0 / jnp.sqrt(fan_in)
        w = jax.random.uniform(kw, (fan_in, fan_out), jnp.float32, -bound, bound)
        b = jax.random.uniform(kb, (1, fan_out), jnp.float32, -bound, bound)
        w_pad = jnp.zeros((pad_in, pad_out), jnp.float32).at[:fan_in, :fan_out].set(w)
        b_pad = jnp.zeros((1, pad_out), jnp.float32).at[:, :fan_out].set(b)
        return w_pad.astype(jnp.bfloat16), b_pad, w, b

    k0, k1, k2, k3 = jax.random.split(key, 4)
    w0, b0, w0f, b0f = linear(k0, N_FEATURES, H0, F_PAD, H0)
    w1, b1, w1f, b1f = linear(k1, H0, H1, H0, H1)
    w2, b2, w2f, b2f = linear(k2, H1, H2, H1, H2)
    w3, b3, w3f, b3f = linear(k3, H2, N_OUT, H2, N_OUT_PAD)
    params = dict(w0=w0, b0=b0, w1=w1, b1=b1, w2=w2, b2=b2, w3=w3, b3=b3)
    params_f32 = dict(w0=w0f, b0=b0f, w1=w1f, b1=b1f,
                      w2=w2f, b2=b2f, w3=w3f, b3=b3f)
    return params, params_f32


def reference_forward_matched(x, p):
    """Pure-JAX reference making the identical precision choices as the kernel
    (bf16 weights/activations into each dot, f32 accumulation, bf16 output)."""
    B = x.shape[0]
    b_pad = ((B + B_SUBLANE - 1) // B_SUBLANE) * B_SUBLANE
    h = jnp.zeros((b_pad, F_PAD), jnp.float32).at[:B, :N_FEATURES].set(x)
    h = _leaky_relu(jnp.dot(h.astype(jnp.bfloat16), p["w0"],
                            preferred_element_type=jnp.float32) + p["b0"])
    h = _leaky_relu(jnp.dot(h.astype(jnp.bfloat16), p["w1"],
                            preferred_element_type=jnp.float32) + p["b1"])
    h = _leaky_relu(jnp.dot(h.astype(jnp.bfloat16), p["w2"],
                            preferred_element_type=jnp.float32) + p["b2"])
    out = jnp.tanh(jnp.dot(h.astype(jnp.bfloat16), p["w3"],
                           preferred_element_type=jnp.float32) + p["b3"])
    return out.astype(jnp.bfloat16)[:B, :N_OUT].astype(jnp.float32)


def reference_forward_f32(x, pf):
    """Full float32 reference (matches the PyTorch module numerics)."""
    h = _leaky_relu(x @ pf["w0"] + pf["b0"])
    h = _leaky_relu(h @ pf["w1"] + pf["b1"])
    h = _leaky_relu(h @ pf["w2"] + pf["b2"])
    return jnp.tanh(h @ pf["w3"] + pf["b3"])


if __name__ == "__main__":
    key = jax.random.PRNGKey(0)
    kx, kp = jax.random.split(key)

    B = 2  # noise vectors of size n_features=100, per the module
    x = jax.random.normal(kx, (B, N_FEATURES), jnp.float32)
    params, params_f32 = init_params(kp)

    out = jax.block_until_ready(generator_forward(x, params))
    assert out.shape == (B, N_OUT), out.shape

    # Check against a reference with the same bf16/f32 precision choices
    # (loose only by bf16 rounding-boundary effects).
    ref_m = jax.block_until_ready(reference_forward_matched(x, params))
    err_m = float(jnp.max(jnp.abs(out - ref_m)))
    assert err_m < 1.5e-2, ("matched-precision mismatch", err_m)

    # Check against the full-f32 PyTorch-equivalent reference
    # (bf16 weight quantization + bf16 output rounding, tanh-bounded).
    ref_f = jax.block_until_ready(reference_forward_f32(x, params_f32))
    err_f = float(jnp.max(jnp.abs(out - ref_f)))
    assert err_f < 4e-2, ("f32 reference mismatch", err_f)

    print("KERNEL_OK")
</pallas_src>

<mosaic_0001>
module attributes {stable_mosaic.version = 11 : i64} {
  func.func @hidden_kernel(%arg0: memref<8x128xf32, #tpu.memory_space<vmem>>, %arg1: memref<128x256xbf16, #tpu.memory_space<vmem>>, %arg2: memref<1x256xf32, #tpu.memory_space<vmem>>, %arg3: memref<256x128xbf16, #tpu.memory_space<vmem>>, %arg4: memref<1x128xf32, #tpu.memory_space<vmem>>, %arg5: memref<128x256xbf16, #tpu.memory_space<vmem>>, %arg6: memref<1x256xf32, #tpu.memory_space<vmem>>, %arg7: memref<8x256xbf16, #tpu.memory_space<vmem>>) attributes {dimension_semantics = [], scalar_prefetch = 0 : i64, scratch_operands = 0 : i64, tpu.core_type = #tpu.core_type<tc>} {
    %c0 = arith.constant 0 : index
    %c0_0 = arith.constant 0 : index
    %0 = vector.load %arg0[%c0, %c0_0] : memref<8x128xf32, #tpu.memory_space<vmem>>, vector<8x128xf32>
    %1 = arith.truncf %0 : vector<8x128xf32> to vector<8x128xbf16>
    %c0_1 = arith.constant 0 : index
    %c0_2 = arith.constant 0 : index
    %2 = vector.load %arg1[%c0_1, %c0_2] : memref<128x256xbf16, #tpu.memory_space<vmem>>, vector<128x256xbf16>
    %cst = arith.constant dense<0.000000e+00> : vector<8x256xf32>
    %3 = tpu.matmul %1, %2, %cst {dimension_numbers = #tpu.dot_dimension_numbers<[1], [0], [0], [1], [0, 0, 1, 1], [], []>} : vector<8x128xbf16>, vector<128x256xbf16>, vector<8x256xf32> -> vector<8x256xf32>
    %c0_3 = arith.constant 0 : index
    %c0_4 = arith.constant 0 : index
    %4 = vector.load %arg2[%c0_3, %c0_4] : memref<1x256xf32, #tpu.memory_space<vmem>>, vector<1x256xf32>
    %5 = vector.broadcast %4 : vector<1x256xf32> to vector<8x256xf32>
    %6 = arith.addf %3, %5 : vector<8x256xf32>
    %cst_5 = arith.constant 0.000000e+00 : f32
    %7 = vector.broadcast %cst_5 : f32 to vector<8x256xf32>
    %8 = arith.cmpf ogt, %6, %7 : vector<8x256xf32>
    %cst_6 = arith.constant 2.000000e-01 : f32
    %9 = vector.broadcast %cst_6 : f32 to vector<8x256xf32>
    %10 = arith.mulf %9, %6 : vector<8x256xf32>
    %11 = arith.select %8, %6, %10 : vector<8x256xi1>, vector<8x256xf32>
    %12 = arith.truncf %11 : vector<8x256xf32> to vector<8x256xbf16>
    %c0_7 = arith.constant 0 : index
    %c0_8 = arith.constant 0 : index
    %13 = vector.load %arg3[%c0_7, %c0_8] : memref<256x128xbf16, #tpu.memory_space<vmem>>, vector<256x128xbf16>
    %cst_9 = arith.constant dense<0.000000e+00> : vector<8x128xf32>
    %14 = tpu.matmul %12, %13, %cst_9 {dimension_numbers = #tpu.dot_dimension_numbers<[1], [0], [0], [1], [0, 0, 1, 1], [], []>} : vector<8x256xbf16>, vector<256x128xbf16>, vector<8x128xf32> -> vector<8x128xf32>
    %c0_10 = arith.constant 0 : index
    %c0_11 = arith.constant 0 : index
    %15 = vector.load %arg4[%c0_10, %c0_11] : memref<1x128xf32, #tpu.memory_space<vmem>>, vector<1x128xf32>
    %16 = vector.broadcast %15 : vector<1x128xf32> to vector<8x128xf32>
    %17 = arith.addf %14, %16 : vector<8x128xf32>
    %cst_12 = arith.constant 0.000000e+00 : f32
    %18 = vector.broadcast %cst_12 : f32 to vector<8x128xf32>
    %19 = arith.cmpf ogt, %17, %18 : vector<8x128xf32>
    %cst_13 = arith.constant 2.000000e-01 : f32
    %20 = vector.broadcast %cst_13 : f32 to vector<8x128xf32>
    %21 = arith.mulf %20, %17 : vector<8x128xf32>
    %22 = arith.select %19, %17, %21 : vector<8x128xi1>, vector<8x128xf32>
    %23 = arith.truncf %22 : vector<8x128xf32> to vector<8x128xbf16>
    %c0_14 = arith.constant 0 : index
    %c0_15 = arith.constant 0 : index
    %24 = vector.load %arg5[%c0_14, %c0_15] : memref<128x256xbf16, #tpu.memory_space<vmem>>, vector<128x256xbf16>
    %cst_16 = arith.constant dense<0.000000e+00> : vector<8x256xf32>
    %25 = tpu.matmul %23, %24, %cst_16 {dimension_numbers = #tpu.dot_dimension_numbers<[1], [0], [0], [1], [0, 0, 1, 1], [], []>} : vector<8x128xbf16>, vector<128x256xbf16>, vector<8x256xf32> -> vector<8x256xf32>
    %c0_17 = arith.constant 0 : index
    %c0_18 = arith.constant 0 : index
    %26 = vector.load %arg6[%c0_17, %c0_18] : memref<1x256xf32, #tpu.memory_space<vmem>>, vector<1x256xf32>
    %27 = vector.broadcast %26 : vector<1x256xf32> to vector<8x256xf32>
    %28 = arith.addf %25, %27 : vector<8x256xf32>
    %cst_19 = arith.constant 0.000000e+00 : f32
    %29 = vector.broadcast %cst_19 : f32 to vector<8x256xf32>
    %30 = arith.cmpf ogt, %28, %29 : vector<8x256xf32>
    %cst_20 = arith.constant 2.000000e-01 : f32
    %31 = vector.broadcast %cst_20 : f32 to vector<8x256xf32>
    %32 = arith.mulf %31, %28 : vector<8x256xf32>
    %33 = arith.select %30, %28, %32 : vector<8x256xi1>, vector<8x256xf32>
    %34 = arith.truncf %33 : vector<8x256xf32> to vector<8x256xbf16>
    %c0_21 = arith.constant 0 : index
    %c0_22 = arith.constant 0 : index
    %35 = vector.load %arg7[%c0_21, %c0_22] : memref<8x256xbf16, #tpu.memory_space<vmem>>, vector<8x256xbf16>
    tpu.vector_store %arg7[%c0_21, %c0_22], %34 {strides = array<i32>} : memref<8x256xbf16, #tpu.memory_space<vmem>>, vector<8x256xbf16>,
    return
  }
}

</mosaic_0001>

<llo_original>
// kernel: tpu_custom_call.1
$region0: #{tpu_custom_call.1}
  #allocation0 [shape = 'u32[]', space=smem, size = 0x4, offset = 0x4, fixed_abs, tag = 'smem constant byte address 0x4 - core index']
  #allocation1 [shape = 'u32[144,128]{1,0:T(1,128)}', space=vmem, size = 0x12000, scoped, tag = 'internal scratch']
  %s0 = inlined_call_operand.hbm [shape: f32[8,128], index: 0, kind: input, shape index: {}]
  %s1 = inlined_call_operand.hbm [shape: bf16[128,256], index: 1, kind: input, shape index: {}]
  %s2 = inlined_call_operand.vmem [shape: f32[1,256], index: 2, kind: input, shape index: {}]
  %s3 = inlined_call_operand.hbm [shape: bf16[256,128], index: 3, kind: input, shape index: {}]
  %s4 = inlined_call_operand.vmem [shape: f32[1,128], index: 4, kind: input, shape index: {}]
  %s5 = inlined_call_operand.hbm [shape: bf16[128,256], index: 5, kind: input, shape index: {}]
  %s6 = inlined_call_operand.vmem [shape: f32[1,256], index: 6, kind: input, shape index: {}]
  %s7 = inlined_call_operand.hbm [shape: bf16[8,256], index: 7, kind: output, shape index: {}]
  %s8 = sld [smem:[#allocation0]]
  $region54: #{tpu_custom_call.1} parent=0
    _
  %s10 = ssub.s32 1, %s8
  %s11 = scalar_select 0, %s10, %s8
  $region1: #{tpu_custom_call.1} parent=0
    #allocation2 [shape = 'u8[4096]{0}', space=vmem, size = 0x1000, scoped, tag = 'input window, operand 0, single buffered']
    #allocation3 [shape = 's32[1]{0}', space=sflag, size = 0x4, scoped, tag = 'scoped memory for tpu_custom_call.1']
    #allocation4 [shape = 's32[1]{0}', space=sflag, size = 0x4, scoped, tag = 'scoped memory for tpu_custom_call.1']
    #allocation5 [shape = 'u8[65536]{0}', space=vmem, size = 0x10000, scoped, tag = 'input window, operand 1, single buffered']
    #allocation6 [shape = 's32[1]{0}', space=sflag, size = 0x4, scoped, tag = 'scoped memory for tpu_custom_call.1']
    #allocation7 [shape = 'u8[65536]{0}', space=vmem, size = 0x10000, scoped, tag = 'input window, operand 3, single buffered']
    #allocation8 [shape = 'u8[65536]{0}', space=vmem, size = 0x10000, scoped, tag = 'input window, operand 5, single buffered']
    #allocation9 [shape = 's32[1]{0}', space=sflag, size = 0x4, scoped, tag = 'scoped memory for tpu_custom_call.1']
    #allocation10 [shape = 'u8[4096]{0}', space=vmem, size = 0x1000, scoped, tag = 'output window, operand 0, single buffered']
    %12 = vsyncpa [#allocation3], 0
    %13 = vsyncpa [#allocation6], 0
    %14 = vsyncpa [#allocation9], 0
    %15 = vsyncpa [#allocation4], 0
    // Predicated region
    $region2: #{tpu_custom_call.1} parent=1 // pred_check
      _
    $region3: #{tpu_custom_call.1} parent=1 // pred_check_branch
      %17 = sbr.rel (0) target = $region5
    $region4: #{tpu_custom_call.1} parent=1 // pred_region
      %s19 = ssub.s32 128, 128
      %20 = vsyncadd [#allocation3], %s19
      %s22 = sshll.u32 [#allocation2], 4
      %s23 = int_to_ptr.vmem [resolvable:$true] %s22
      %25 = dma.hbm_to_vmem [thread:$0]  %s0, 128, %s23, [#allocation3]
    $region5: #{tpu_custom_call.1} parent=1 // pred_fallthru
      _
    // Predicated region
    $region6: #{tpu_custom_call.1} parent=1 // pred_check
      _
    $region7: #{tpu_custom_call.1} parent=1 // pred_check_branch
      %27 = sbr.rel (0) target = $region9
    $region8: #{tpu_custom_call.1} parent=1 // pred_region
      %s29 = ssub.s32 2048, 2048
      %30 = vsyncadd [#allocation6], %s29
      %s31 = sshll.u32 [#allocation5], 4
      %s32 = int_to_ptr.vmem [resolvable:$true] %s31
      %37 = dma.hbm_to_vmem [thread:$0]  %s1, 2048, %s32, [#allocation6], 128, 128, 8
    $region9: #{tpu_custom_call.1} parent=1 // pred_fallthru
      _
    // Predicated region
    $region10: #{tpu_custom_call.1} parent=1 // pred_check
      _
    $region11: #{tpu_custom_call.1} parent=1 // pred_check_branch
      %39 = sbr.rel (0) target = $region13
    $region12: #{tpu_custom_call.1} parent=1 // pred_region
      _
    $region13: #{tpu_custom_call.1} parent=1 // pred_fallthru
      _
    // Predicated region
    $region14: #{tpu_custom_call.1} parent=1 // pred_check
      _
    $region15: #{tpu_custom_call.1} parent=1 // pred_check_branch
      %41 = sbr.rel (0) target = $region17
    $region16: #{tpu_custom_call.1} parent=1 // pred_region
      %s43 = ssub.s32 2048, 2048
      %44 = vsyncadd [#allocation6], %s43
      %s45 = sshll.u32 [#allocation7], 4
      %s46 = int_to_ptr.vmem [resolvable:$true] %s45
      %51 = dma.hbm_to_vmem [thread:$0]  %s3, 2048, %s46, [#allocation6], 64, 64, 4
    $region17: #{tpu_custom_call.1} parent=1 // pred_fallthru
      _
    // Predicated region
    $region18: #{tpu_custom_call.1} parent=1 // pred_check
      _
    $region19: #{tpu_custom_call.1} parent=1 // pred_check_branch
      %53 = sbr.rel (0) target = $region21
    $region20: #{tpu_custom_call.1} parent=1 // pred_region
      _
    $region21: #{tpu_custom_call.1} parent=1 // pred_fallthru
      _
    // Predicated region
    $region22: #{tpu_custom_call.1} parent=1 // pred_check
      _
    $region23: #{tpu_custom_call.1} parent=1 // pred_check_branch
      %55 = sbr.rel (0) target = $region25
    $region24: #{tpu_custom_call.1} parent=1 // pred_region
      %s57 = ssub.s32 2048, 2048
      %58 = vsyncadd [#allocation9], %s57
      %s59 = sshll.u32 [#allocation8], 4
      %s60 = int_to_ptr.vmem [resolvable:$true] %s59
      %65 = dma.hbm_to_vmem [thread:$0]  %s5, 2048, %s60, [#allocation9], 128, 128, 8
    $region25: #{tpu_custom_call.1} parent=1 // pred_fallthru
      _
    // Predicated region
    $region26: #{tpu_custom_call.1} parent=1 // pred_check
      _
    $region27: #{tpu_custom_call.1} parent=1 // pred_check_branch
      %67 = sbr.rel (0) target = $region29
    $region28: #{tpu_custom_call.1} parent=1 // pred_region
      _
    $region29: #{tpu_custom_call.1} parent=1 // pred_fallthru
      _
    // Predicated region
    $region30: #{tpu_custom_call.1} parent=1 // pred_check
      _
    $region31: #{tpu_custom_call.1} parent=1 // pred_check_branch
      %69 = sbr.rel (0) target = $region33
    $region32: #{tpu_custom_call.1} parent=1 // pred_region
      %70 = dma.done [#allocation3], 128
    $region33: #{tpu_custom_call.1} parent=1 // pred_fallthru
      _
    // Predicated region
    $region34: #{tpu_custom_call.1} parent=1 // pred_check
      _
    $region35: #{tpu_custom_call.1} parent=1 // pred_check_branch
      %72 = sbr.rel (0) target = $region37
    $region36: #{tpu_custom_call.1} parent=1 // pred_region
      %73 = dma.done [#allocation6], 2048
    $region37: #{tpu_custom_call.1} parent=1 // pred_fallthru
      _
    // Predicated region
    $region38: #{tpu_custom_call.1} parent=1 // pred_check
      _
    $region39: #{tpu_custom_call.1} parent=1 // pred_check_branch
      %75 = sbr.rel (0) target = $region41
    $region40: #{tpu_custom_call.1} parent=1 // pred_region
      %76 = dma.done [#allocation6], 2048
    $region41: #{tpu_custom_call.1} parent=1 // pred_fallthru
      _
    // Predicated region
    $region42: #{tpu_custom_call.1} parent=1 // pred_check
      _
    $region43: #{tpu_custom_call.1} parent=1 // pred_check_branch
      %78 = sbr.rel (0) target = $region45
    $region44: #{tpu_custom_call.1} parent=1 // pred_region
      %79 = dma.done [#allocation9], 2048
    $region45: #{tpu_custom_call.1} parent=1 // pred_fallthru
      _
    %v81 = vld [vmem:[#allocation2] sm:$0xff]
    %v82 = vpack.c.bf16 %v81, %v81
    %v83 = vld [vmem:[#allocation5] sm:$0xff]
    %v84 = vld [vmem:[#allocation5 + $0x8] sm:$0xff]
    %v85 = vld [vmem:[#allocation5 + $0x10] sm:$0xff]
    %v86 = vld [vmem:[#allocation5 + $0x18] sm:$0xff]
    %v87 = vld [vmem:[#allocation5 + $0x20] sm:$0xff]
    %v88 = vld [vmem:[#allocation5 + $0x28] sm:$0xff]
    %v89 = vld [vmem:[#allocation5 + $0x30] sm:$0xff]
    %v90 = vld [vmem:[#allocation5 + $0x38] sm:$0xff]
    %v91 = vld [vmem:[#allocation5 + $0x40] sm:$0xff]
    %v92 = vld [vmem:[#allocation5 + $0x48] sm:$0xff]
    %v93 = vld [vmem:[#allocation5 + $0x50] sm:$0xff]
    %v94 = vld [vmem:[#allocation5 + $0x58] sm:$0xff]
    %v95 = vld [vmem:[#allocation5 + $0x60] sm:$0xff]
    %v96 = vld [vmem:[#allocation5 + $0x68] sm:$0xff]
    %v97 = vld [vmem:[#allocation5 + $0x70] sm:$0xff]
    %v98 = vld [vmem:[#allocation5 + $0x78] sm:$0xff]
    %v99 = vld [vmem:[%s2] sm:$0x3]
    %v101 = vlaneseq
    %v102 = vshrl.u32 %v101, 7
    %v103 = vsub.s32 0, %v102
    %v104 = vrot.slane %v99, %v103
    %v105 = vlaneseq
    %v106 = vshrl.u32 %v105, 7
    %v107 = vsub.s32 1, %v106
    %v108 = vrot.slane %v99, %v107
    %v127 = vunpack.c.l.b16 %v83
    %v128 = vunpack.c.h.b16 %v83
    %v129 = vunpack.c.l.b16 %v84
    %v130 = vunpack.c.h.b16 %v84
    %v131 = vunpack.c.l.b16 %v85
    %v132 = vunpack.c.h.b16 %v85
    %v133 = vunpack.c.l.b16 %v86
    %v134 = vunpack.c.h.b16 %v86
    %v135 = vunpack.c.l.b16 %v87
    %v136 = vunpack.c.h.b16 %v87
    %v137 = vunpack.c.l.b16 %v88
    %v138 = vunpack.c.h.b16 %v88
    %v139 = vunpack.c.l.b16 %v89
    %v140 = vunpack.c.h.b16 %v89
    %v141 = vunpack.c.l.b16 %v90
    %v142 = vunpack.c.h.b16 %v90
    %v143 = vunpack.c.l.b16 %v91
    %v144 = vunpack.c.h.b16 %v91
    %v145 = vunpack.c.l.b16 %v92
    %v146 = vunpack.c.h.b16 %v92
    %v147 = vunpack.c.l.b16 %v93
    %v148 = vunpack.c.h.b16 %v93
    %v149 = vunpack.c.l.b16 %v94
    %v150 = vunpack.c.h.b16 %v94
    %v151 = vunpack.c.l.b16 %v95
    %v152 = vunpack.c.h.b16 %v95
    %v153 = vunpack.c.l.b16 %v96
    %v154 = vunpack.c.h.b16 %v96
    %v155 = vunpack.c.l.b16 %v97
    %v156 = vunpack.c.h.b16 %v97
    %v157 = vunpack.c.l.b16 %v98
    %v158 = vunpack.c.h.b16 %v98
    %v159 = vpack.c.b16 %v129, %v127
    %v160 = vpack.c.b16 %v130, %v128
    %v161 = vpack.c.b16 %v133, %v131
    %v162 = vpack.c.b16 %v134, %v132
    %v163 = vpack.c.b16 %v137, %v135
    %v164 = vpack.c.b16 %v138, %v136
    %v165 = vpack.c.b16 %v141, %v139
    %v166 = vpack.c.b16 %v142, %v140
    %v167 = vpack.c.b16 %v145, %v143
    %v168 = vpack.c.b16 %v146, %v144
    %v169 = vpack.c.b16 %v149, %v147
    %v170 = vpack.c.b16 %v150, %v148
    %v171 = vpack.c.b16 %v153, %v151
    %v172 = vpack.c.b16 %v154, %v152
    %v173 = vpack.c.b16 %v157, %v155
    %v174 = vpack.c.b16 %v158, %v156
    %191 = vmatprep.subr.bf16.mxu0 %v160
    %192 = vmatpush1.bf16.msra.mxu0 %v159
    %193 = vmatprep.subr.bf16.mxu0 %v162
    %194 = vmatpush1.bf16.msra.mxu0 %v161
    %195 = vmatprep.subr.bf16.mxu0 %v164
    %196 = vmatpush1.bf16.msra.mxu0 %v163
    %197 = vmatprep.subr.bf16.mxu0 %v166
    %198 = vmatpush1.bf16.msra.mxu0 %v165
    %199 = vmatprep.subr.bf16.mxu0 %v168
    %200 = vmatpush1.bf16.msra.mxu0 %v167
    %201 = vmatprep.subr.bf16.mxu0 %v170
    %202 = vmatpush1.bf16.msra.mxu0 %v169
    %203 = vmatprep.subr.bf16.mxu0 %v172
    %204 = vmatpush1.bf16.msra.mxu0 %v171
    %205 = vmatprep.subr.bf16.mxu0 %v174
    %206 = vmatpush1.bf16.msra.mxu0 %v173
    %207 = vmatprep.subr.bf16.mxu0 0
    %208 = vmatpush1.bf16.msra.mxu0 0
    %209 = vmatprep.subr.bf16.mxu0 0
    %210 = vmatpush1.bf16.msra.mxu0 0
    %211 = vmatprep.subr.bf16.mxu0 0
    %212 = vmatpush1.bf16.msra.mxu0 0
    %213 = vmatprep.subr.bf16.mxu0 0
    %214 = vmatpush1.bf16.msra.mxu0 0
    %215 = vmatprep.subr.bf16.mxu0 0
    %216 = vmatpush1.bf16.msra.mxu0 0
    %217 = vmatprep.subr.bf16.mxu0 0
    %218 = vmatpush1.bf16.msra.mxu0 0
    %219 = vmatprep.subr.bf16.mxu0 0
    %220 = vmatpush1.bf16.msra.mxu0 0
    %221 = vmatprep.subr.bf16.mxu0 0
    %222 = vmatpush1.bf16.msra.mxu0 0
    %223 = vmatprep.mubr.bf16.mxu0 0
    %224 = vmatmul.mubr.bf16.gmra.mrb[0].mxu0 %v82
    %v225 = vpop.f32.mrb[0].mxu0
    %v226 = vadd.f32 %v104, %v225
    %v227 = vpop.f32.mrb[0].mxu0
    %v228 = vadd.f32 %v108, %v227
    %v229 = vpop.f32.mrb[0].mxu0
    %v230 = vpop.f32.mrb[0].mxu0
    %231 = vdwg.mxu0
    %vm232 = vcmp.gt.f32.partialorder %v226, 0.0
    %vm233 = vcmp.gt.f32.partialorder %v228, 0.0
    %v234 = vmul.f32 %v226, 0.2
    %v235 = vmul.f32 %v228, 0.2
    %v236 = vsel %vm232, %v226, %v234
    %v237 = vsel %vm233, %v228, %v235
    %v238 = vpack.c.bf16 %v236, %v236
    %v239 = vpack.c.bf16 %v237, %v237
    %v240 = vld [vmem:[#allocation7] sm:$0xf]
    %v241 = vld [vmem:[#allocation7 + $0x4] sm:$0xf]
    %v242 = vld [vmem:[#allocation7 + $0x8] sm:$0xf]
    %v243 = vld [vmem:[#allocation7 + $0xc] sm:$0xf]
    %v244 = vld [vmem:[#allocation7 + $0x10] sm:$0xf]
    %v245 = vld [vmem:[#allocation7 + $0x14] sm:$0xf]
    %v246 = vld [vmem:[#allocation7 + $0x18] sm:$0xf]
    %v247 = vld [vmem:[#allocation7 + $0x1c] sm:$0xf]
    %v248 = vld [vmem:[#allocation7 + $0x20] sm:$0xf]
    %v249 = vld [vmem:[#allocation7 + $0x24] sm:$0xf]
    %v250 = vld [vmem:[#allocation7 + $0x28] sm:$0xf]
    %v251 = vld [vmem:[#allocation7 + $0x2c] sm:$0xf]
    %v252 = vld [vmem:[#allocation7 + $0x30] sm:$0xf]
    %v253 = vld [vmem:[#allocation7 + $0x34] sm:$0xf]
    %v254 = vld [vmem:[#allocation7 + $0x38] sm:$0xf]
    %v255 = vld [vmem:[#allocation7 + $0x3c] sm:$0xf]
    %v256 = vld [vmem:[#allocation7 + $0x40] sm:$0xf]
    %v257 = vld [vmem:[#allocation7 + $0x44] sm:$0xf]
    %v258 = vld [vmem:[#allocation7 + $0x48] sm:$0xf]
    %v259 = vld [vmem:[#allocation7 + $0x4c] sm:$0xf]
    %v260 = vld [vmem:[#allocation7 + $0x50] sm:$0xf]
    %v261 = vld [vmem:[#allocation7 + $0x54] sm:$0xf]
    %v262 = vld [vmem:[#allocation7 + $0x58] sm:$0xf]
    %v263 = vld [vmem:[#allocation7 + $0x5c] sm:$0xf]
    %v264 = vld [vmem:[#allocation7 + $0x60] sm:$0xf]
    %v265 = vld [vmem:[#allocation7 + $0x64] sm:$0xf]
    %v266 = vld [vmem:[#allocation7 + $0x68] sm:$0xf]
    %v267 = vld [vmem:[#allocation7 + $0x6c] sm:$0xf]
    %v268 = vld [vmem:[#allocation7 + $0x70] sm:$0xf]
    %v269 = vld [vmem:[#allocation7 + $0x74] sm:$0xf]
    %v270 = vld [vmem:[#allocation7 + $0x78] sm:$0xf]
    %v271 = vld [vmem:[#allocation7 + $0x7c] sm:$0xf]
    %v272 = vld [vmem:[%s4] sm:$0x1]
    %v274 = vlaneseq
    %v275 = vshrl.u32 %v274, 7
    %v276 = vsub.s32 0, %v275
    %v277 = vrot.slane %v272, %v276
    %v311 = vunpack.c.l.b16 %v240
    %v312 = vunpack.c.l.b16 %v241
    %v313 = vunpack.c.l.b16 %v242
    %v314 = vunpack.c.l.b16 %v243
    %v315 = vunpack.c.l.b16 %v244
    %v316 = vunpack.c.l.b16 %v245
    %v317 = vunpack.c.l.b16 %v246
    %v318 = vunpack.c.l.b16 %v247
    %v319 = vunpack.c.l.b16 %v248
    %v320 = vunpack.c.l.b16 %v249
    %v321 = vunpack.c.l.b16 %v250
    %v322 = vunpack.c.l.b16 %v251
    %v323 = vunpack.c.l.b16 %v252
    %v324 = vunpack.c.l.b16 %v253
    %v325 = vunpack.c.l.b16 %v254
    %v326 = vunpack.c.l.b16 %v255
    %v327 = vunpack.c.l.b16 %v256
    %v328 = vunpack.c.l.b16 %v257
    %v329 = vunpack.c.l.b16 %v258
    %v330 = vunpack.c.l.b16 %v259
    %v331 = vunpack.c.l.b16 %v260
    %v332 = vunpack.c.l.b16 %v261
    %v333 = vunpack.c.l.b16 %v262
    %v334 = vunpack.c.l.b16 %v263
    %v335 = vunpack.c.l.b16 %v264
    %v336 = vunpack.c.l.b16 %v265
    %v337 = vunpack.c.l.b16 %v266
    %v338 = vunpack.c.l.b16 %v267
    %v339 = vunpack.c.l.b16 %v268
    %v340 = vunpack.c.l.b16 %v269
    %v341 = vunpack.c.l.b16 %v270
    %v342 = vunpack.c.l.b16 %v271
    %v343 = vpack.c.b16 %v312, %v311
    %v344 = vpack.c.b16 %v314, %v313
    %v345 = vpack.c.b16 %v316, %v315
    %v346 = vpack.c.b16 %v318, %v317
    %v347 = vpack.c.b16 %v320, %v319
    %v348 = vpack.c.b16 %v322, %v321
    %v349 = vpack.c.b16 %v324, %v323
    %v350 = vpack.c.b16 %v326, %v325
    %v351 = vpack.c.b16 %v328, %v327
    %v352 = vpack.c.b16 %v330, %v329
    %v353 = vpack.c.b16 %v332, %v331
    %v354 = vpack.c.b16 %v334, %v333
    %v355 = vpack.c.b16 %v336, %v335
    %v356 = vpack.c.b16 %v338, %v337
    %v357 = vpack.c.b16 %v340, %v339
    %v358 = vpack.c.b16 %v342, %v341
    %375 = vmatprep.subr.bf16.mxu0 0
    %376 = vmatpush1.bf16.msra.mxu0 %v343
    %377 = vmatprep.subr.bf16.mxu0 0
    %378 = vmatpush1.bf16.msra.mxu0 %v344
    %379 = vmatprep.subr.bf16.mxu0 0
    %380 = vmatpush1.bf16.msra.mxu0 %v345
    %381 = vmatprep.subr.bf16.mxu0 0
    %382 = vmatpush1.bf16.msra.mxu0 %v346
    %383 = vmatprep.subr.bf16.mxu0 0
    %384 = vmatpush1.bf16.msra.mxu0 %v347
    %385 = vmatprep.subr.bf16.mxu0 0
    %386 = vmatpush1.bf16.msra.mxu0 %v348
    %387 = vmatprep.subr.bf16.mxu0 0
    %388 = vmatpush1.bf16.msra.mxu0 %v349
    %389 = vmatprep.subr.bf16.mxu0 0
    %390 = vmatpush1.bf16.msra.mxu0 %v350
    %391 = vmatprep.subr.bf16.mxu0 0
    %392 = vmatpush1.bf16.msra.mxu0 %v351
    %393 = vmatprep.subr.bf16.mxu0 0
    %394 = vmatpush1.bf16.msra.mxu0 %v352
    %395 = vmatprep.subr.bf16.mxu0 0
    %396 = vmatpush1.bf16.msra.mxu0 %v353
    %397 = vmatprep.subr.bf16.mxu0 0
    %398 = vmatpush1.bf16.msra.mxu0 %v354
    %399 = vmatprep.subr.bf16.mxu0 0
    %400 = vmatpush1.bf16.msra.mxu0 %v355
    %401 = vmatprep.subr.bf16.mxu0 0
    %402 = vmatpush1.bf16.msra.mxu0 %v356
    %403 = vmatprep.subr.bf16.mxu0 0
    %404 = vmatpush1.bf16.msra.mxu0 %v357
    %405 = vmatprep.subr.bf16.mxu0 0
    %406 = vmatpush1.bf16.msra.mxu0 %v358
    %407 = vmatprep.mubr.bf16.mxu0 %v239
    %408 = vmatmul.mubr.bf16.gmra.mrb[0].mxu0 %v238
    %v409 = vpop.f32.mrb[0].mxu0
    %v410 = vadd.f32 %v277, %v409
    %v411 = vpop.f32.mrb[0].mxu0
    %v412 = vpop.f32.mrb[0].mxu0
    %v413 = vpop.f32.mrb[0].mxu0
    %414 = vdwg.mxu0
    %vm415 = vcmp.gt.f32.partialorder %v410, 0.0
    %v416 = vmul.f32 %v410, 0.2
    %v417 = vsel %vm415, %v410, %v416
    %v418 = vpack.c.bf16 %v417, %v417
    %v419 = vld [vmem:[#allocation8] sm:$0xff]
    %v420 = vld [vmem:[#allocation8 + $0x8] sm:$0xff]
    %v421 = vld [vmem:[#allocation8 + $0x10] sm:$0xff]
    %v422 = vld [vmem:[#allocation8 + $0x18] sm:$0xff]
    %v423 = vld [vmem:[#allocation8 + $0x20] sm:$0xff]
    %v424 = vld [vmem:[#allocation8 + $0x28] sm:$0xff]
    %v425 = vld [vmem:[#allocation8 + $0x30] sm:$0xff]
    %v426 = vld [vmem:[#allocation8 + $0x38] sm:$0xff]
    %v427 = vld [vmem:[#allocation8 + $0x40] sm:$0xff]
    %v428 = vld [vmem:[#allocation8 + $0x48] sm:$0xff]
    %v429 = vld [vmem:[#allocation8 + $0x50] sm:$0xff]
    %v430 = vld [vmem:[#allocation8 + $0x58] sm:$0xff]
    %v431 = vld [vmem:[#allocation8 + $0x60] sm:$0xff]
    %v432 = vld [vmem:[#allocation8 + $0x68] sm:$0xff]
    %v433 = vld [vmem:[#allocation8 + $0x70] sm:$0xff]
    %v434 = vld [vmem:[#allocation8 + $0x78] sm:$0xff]
    %v435 = vld [vmem:[%s6] sm:$0x3]
    %v437 = vlaneseq
    %v438 = vshrl.u32 %v437, 7
    %v439 = vsub.s32 0, %v438
    %v440 = vrot.slane %v435, %v439
    %v441 = vlaneseq
    %v442 = vshrl.u32 %v441, 7
    %v443 = vsub.s32 1, %v442
    %v444 = vrot.slane %v435, %v443
    %v463 = vunpack.c.l.b16 %v419
    %v464 = vunpack.c.h.b16 %v419
    %v465 = vunpack.c.l.b16 %v420
    %v466 = vunpack.c.h.b16 %v420
    %v467 = vunpack.c.l.b16 %v421
    %v468 = vunpack.c.h.b16 %v421
    %v469 = vunpack.c.l.b16 %v422
    %v470 = vunpack.c.h.b16 %v422
    %v471 = vunpack.c.l.b16 %v423
    %v472 = vunpack.c.h.b16 %v423
    %v473 = vunpack.c.l.b16 %v424
    %v474 = vunpack.c.h.b16 %v424
    %v475 = vunpack.c.l.b16 %v425
    %v476 = vunpack.c.h.b16 %v425
    %v477 = vunpack.c.l.b16 %v426
    %v478 = vunpack.c.h.b16 %v426
    %v479 = vunpack.c.l.b16 %v427
    %v480 = vunpack.c.h.b16 %v427
    %v481 = vunpack.c.l.b16 %v428
    %v482 = vunpack.c.h.b16 %v428
    %v483 = vunpack.c.l.b16 %v429
    %v484 = vunpack.c.h.b16 %v429
    %v485 = vunpack.c.l.b16 %v430
    %v486 = vunpack.c.h.b16 %v430
    %v487 = vunpack.c.l.b16 %v431
    %v488 = vunpack.c.h.b16 %v431
    %v489 = vunpack.c.l.b16 %v432
    %v490 = vunpack.c.h.b16 %v432
    %v491 = vunpack.c.l.b16 %v433
    %v492 = vunpack.c.h.b16 %v433
    %v493 = vunpack.c.l.b16 %v434
    %v494 = vunpack.c.h.b16 %v434
    %v495 = vpack.c.b16 %v465, %v463
    %v496 = vpack.c.b16 %v466, %v464
    %v497 = vpack.c.b16 %v469, %v467
    %v498 = vpack.c.b16 %v470, %v468
    %v499 = vpack.c.b16 %v473, %v471
    %v500 = vpack.c.b16 %v474, %v472
    %v501 = vpack.c.b16 %v477, %v475
    %v502 = vpack.c.b16 %v478, %v476
    %v503 = vpack.c.b16 %v481, %v479
    %v504 = vpack.c.b16 %v482, %v480
    %v505 = vpack.c.b16 %v485, %v483
    %v506 = vpack.c.b16 %v486, %v484
    %v507 = vpack.c.b16 %v489, %v487
    %v508 = vpack.c.b16 %v490, %v488
    %v509 = vpack.c.b16 %v493, %v491
    %v510 = vpack.c.b16 %v494, %v492
    %527 = vmatprep.subr.bf16.mxu0 %v496
    %528 = vmatpush1.bf16.msra.mxu0 %v495
    %529 = vmatprep.subr.bf16.mxu0 %v498
    %530 = vmatpush1.bf16.msra.mxu0 %v497
    %531 = vmatprep.subr.bf16.mxu0 %v500
    %532 = vmatpush1.bf16.msra.mxu0 %v499
    %533 = vmatprep.subr.bf16.mxu0 %v502
    %534 = vmatpush1.bf16.msra.mxu0 %v501
    %535 = vmatprep.subr.bf16.mxu0 %v504
    %536 = vmatpush1.bf16.msra.mxu0 %v503
    %537 = vmatprep.subr.bf16.mxu0 %v506
    %538 = vmatpush1.bf16.msra.mxu0 %v505
    %539 = vmatprep.subr.bf16.mxu0 %v508
    %540 = vmatpush1.bf16.msra.mxu0 %v507
    %541 = vmatprep.subr.bf16.mxu0 %v510
    %542 = vmatpush1.bf16.msra.mxu0 %v509
    %543 = vmatprep.subr.bf16.mxu0 0
    %544 = vmatpush1.bf16.msra.mxu0 0
    %545 = vmatprep.subr.bf16.mxu0 0
    %546 = vmatpush1.bf16.msra.mxu0 0
    %547 = vmatprep.subr.bf16.mxu0 0
    %548 = vmatpush1.bf16.msra.mxu0 0
    %549 = vmatprep.subr.bf16.mxu0 0
    %550 = vmatpush1.bf16.msra.mxu0 0
    %551 = vmatprep.subr.bf16.mxu0 0
    %552 = vmatpush1.bf16.msra.mxu0 0
    %553 = vmatprep.subr.bf16.mxu0 0
    %554 = vmatpush1.bf16.msra.mxu0 0
    %555 = vmatprep.subr.bf16.mxu0 0
    %556 = vmatpush1.bf16.msra.mxu0 0
    %557 = vmatprep.subr.bf16.mxu0 0
    %558 = vmatpush1.bf16.msra.mxu0 0
    %559 = vmatprep.mubr.bf16.mxu0 0
    %560 = vmatmul.mubr.bf16.gmra.mrb[0].mxu0 %v418
    %v561 = vpop.f32.mrb[0].mxu0
    %v562 = vadd.f32 %v440, %v561
    %v563 = vpop.f32.mrb[0].mxu0
    %v564 = vadd.f32 %v444, %v563
    %v565 = vpop.f32.mrb[0].mxu0
    %v566 = vpop.f32.mrb[0].mxu0
    %567 = vdwg.mxu0
    %vm568 = vcmp.gt.f32.partialorder %v562, 0.0
    %vm569 = vcmp.gt.f32.partialorder %v564, 0.0
    %v570 = vmul.f32 %v562, 0.2
    %v571 = vmul.f32 %v564, 0.2
    %v572 = vsel %vm568, %v562, %v570
    %v573 = vsel %vm569, %v564, %v571
    %v574 = vpack.c.bf16 %v572, %v572
    %v575 = vpack.c.bf16 %v573, %v573
    %v578 = vunpack.c.l.b16 %v574
    %v579 = vunpack.c.l.b16 %v575
    %v580 = vpack.c.b16 %v579, %v578
    %582 = vst [vmem:[#allocation10] sm:$0xff] %v580
    // Predicated region
    $region46: #{tpu_custom_call.1} parent=1 // pred_check
      _
    $region47: #{tpu_custom_call.1} parent=1 // pred_check_branch
      %584 = sbr.rel (0) target = $region49
    $region48: #{tpu_custom_call.1} parent=1 // pred_region
      %s586 = ssub.s32 128, 128
      %587 = vsyncadd [#allocation4], %s586
      %s589 = sshll.u32 [#allocation10], 4
      %s590 = int_to_ptr.vmem [resolvable:$true] %s589
      %592 = dma.vmem_to_hbm [thread:$0]  %s590, 128, %s7, [#allocation4]
    $region49: #{tpu_custom_call.1} parent=1 // pred_fallthru
      _
    // Predicated region
    $region50: #{tpu_custom_call.1} parent=1 // pred_check
      _
    $region51: #{tpu_custom_call.1} parent=1 // pred_check_branch
      %594 = sbr.rel (0) target = $region53
    $region52: #{tpu_custom_call.1} parent=1 // pred_region
      %595 = dma.done [#allocation4], 128
    $region53: #{tpu_custom_call.1} parent=1 // pred_fallthru
      _
    %596 = vsyncpa [#allocation3], 1
    %597 = vsyncpa [#allocation6], 1
    %598 = vsyncpa [#allocation9], 1
    %599 = vsyncpa [#allocation4], 1

</llo_original>
